<compile_context>
chip_gen: v6e
topology: v6e:2x2x1
jax: 0.10.0
libtpu: 0.0.40
codegen_flags: <defaults>
</compile_context>

<pallas_src>
import jax
import jax.numpy as jnp
from jax.experimental import pallas as pl
from jax.experimental.pallas import tpu as pltpu


def _copy_kernel(x_ref, o_ref):
    # Identity copy of the current (TR, L) tile.
    o_ref[...] = x_ref[...]


def _squeezed_shape(shape):
    return tuple(d for d in shape if d != 1)


def _sublane_multiple(dtype):
    # Packed sublanes per vreg row-group: 8 for 4-byte, 16 for 2-byte,
    # 32 for 1-byte dtypes.  Keeps stores fully packed / unmasked.
    itemsize = jnp.dtype(dtype).itemsize
    return max(8, 32 // max(1, itemsize))


def _choose_lanes(n, sub, max_lanes=8192):
    """Largest multiple-of-128 divisor of n (capped), preferring layouts with
    at least `sub` rows so sublanes are fully packed and stores unmasked.
    Returns None if n has no multiple-of-128 divisor."""
    best = None
    lanes = 128
    while lanes <= max_lanes and lanes <= n:
        if n % lanes == 0:
            if n // lanes >= sub:
                best = lanes          # keep growing L while rows stay >= sub
            elif best is None:
                best = lanes          # tiny tensor: rows < sub is unavoidable
        lanes += 128
    return best


@jax.jit
def _squeeze_copy(x):
    """Lane-dense tiled identity-copy kernel + metadata reshape."""
    out_shape = _squeezed_shape(x.shape)
    n = x.size
    itemsize = jnp.dtype(x.dtype).itemsize
    sub = _sublane_multiple(x.dtype)
    lanes = _choose_lanes(n, sub)       # guaranteed not None by the caller
    rows = n // lanes
    flat = x.reshape(rows, lanes)

    # ~2 MiB per operand per block: in+out, double-buffered -> ~8 MiB VMEM,
    # comfortably under the scoped-VMEM defaults on v5e (16 MiB), v6e and
    # v7x (32 MiB).  No vmem_limit_bytes override needed at this size.
    target_block_bytes = 2 * 1024 * 1024
    tr = max(sub, (target_block_bytes // (lanes * itemsize)) // sub * sub)
    tr = min(tr, rows)                  # multiple of sub, or == rows (full dim)

    if tr % sub == 0 and tr < rows:
        # v7x has 2 TensorCores: make sure the "parallel" grid axis has at
        # least 4 blocks to feed both cores (no-op for small tensors).
        while pl.cdiv(rows, tr) < 4 and tr >= 2 * sub:
            tr = (tr // 2) // sub * sub
        # Prefer a row tile that divides `rows` so the last block is not a
        # masked vst.msk store (only accept candidates >= tr // 2).
        if rows % tr != 0:
            cand = tr
            floor = max(sub, tr // 2)
            while cand >= floor:
                if rows % cand == 0:
                    tr = cand
                    break
                cand -= sub

    grid = (pl.cdiv(rows, tr),)         # any remaining edge block is masked

    out_flat = pl.pallas_call(
        _copy_kernel,
        out_shape=jax.ShapeDtypeStruct((rows, lanes), x.dtype),
        grid=grid,
        in_specs=[pl.BlockSpec((tr, lanes), lambda i: (i, 0))],
        out_specs=pl.BlockSpec((tr, lanes), lambda i: (i, 0)),
        cost_estimate=pl.CostEstimate(
            flops=0, transcendentals=0, bytes_accessed=2 * n * itemsize),
        compiler_params=pltpu.CompilerParams(
            dimension_semantics=("parallel",)),
    )(flat)

    # Metadata-only reshape to the squeezed shape.
    return out_flat.reshape(out_shape)


def pallas_squeeze(x):
    """Equivalent of torch.squeeze(x): removes every dimension of size 1."""
    out_shape = _squeezed_shape(x.shape)
    n = x.size
    # Empty tensors and element counts with no multiple-of-128 divisor:
    # squeeze is pure metadata, so a reshape (no kernel, no copy) is both
    # correct and optimal for these shapes.
    if n == 0 or _choose_lanes(n, _sublane_multiple(x.dtype)) is None:
        return jnp.reshape(x, out_shape)
    return _squeeze_copy(x)


if __name__ == "__main__":
    key = jax.random.PRNGKey(0)

    # Primary NCHW input with a squeezable channel dim: (2, 1, 16, 16) -> (2, 16, 16)
    x = jax.random.normal(key, (2, 1, 16, 16), dtype=jnp.float32)
    y = jax.block_until_ready(pallas_squeeze(x))
    ref = jnp.squeeze(x)
    assert y.shape == ref.shape, (y.shape, ref.shape)
    assert y.dtype == ref.dtype
    assert bool(jnp.allclose(y, ref)), "mismatch vs jnp.squeeze reference"

    # Trailing size-1 dim: (2, 4, 16, 1) -> (2, 4, 16)  (lane-dense kernel path)
    x2 = jax.random.normal(jax.random.PRNGKey(1), (2, 4, 16, 1), dtype=jnp.float32)
    y2 = jax.block_until_ready(pallas_squeeze(x2))
    ref2 = jnp.squeeze(x2)
    assert y2.shape == ref2.shape and bool(jnp.allclose(y2, ref2))

    # bf16 input exercises the dtype-aware (16-sublane) tiling:
    # (1, 8, 32, 32) -> (8, 32, 32)
    x3 = jax.random.normal(jax.random.PRNGKey(2), (1, 8, 32, 32)).astype(jnp.bfloat16)
    y3 = jax.block_until_ready(pallas_squeeze(x3))
    ref3 = jnp.squeeze(x3)
    assert y3.shape == ref3.shape and y3.dtype == ref3.dtype
    assert bool(jnp.all(y3 == ref3))

    # Empty tensor: (0, 1, 5) -> (0, 5)  (metadata-only path)
    x4 = jnp.zeros((0, 1, 5), dtype=jnp.float32)
    y4 = jax.block_until_ready(pallas_squeeze(x4))
    assert y4.shape == jnp.squeeze(x4).shape

    print("KERNEL_OK")
</pallas_src>

<mosaic_0001>
module attributes {stable_mosaic.version = 11 : i64} {
  func.func @_copy_kernel(%arg0: i32, %arg1: memref<4x128xf32, #tpu.memory_space<vmem>>, %arg2: memref<4x128xf32, #tpu.memory_space<vmem>>) attributes {dimension_semantics = [#tpu.dimension_semantics<parallel>], iteration_bounds = array<i64: 1>, scalar_prefetch = 0 : i64, scratch_operands = 0 : i64, tpu.core_type = #tpu.core_type<tc>, window_params = [{transform_indices = @transform_0, window_bounds = array<i64: 4, 128>}, {transform_indices = @transform_1, window_bounds = array<i64: 4, 128>}]} {
    %c0 = arith.constant 0 : index
    %c0_0 = arith.constant 0 : index
    %0 = vector.load %arg1[%c0, %c0_0] : memref<4x128xf32, #tpu.memory_space<vmem>>, vector<4x128xf32>
    %c0_1 = arith.constant 0 : index
    %c0_2 = arith.constant 0 : index
    %1 = vector.load %arg2[%c0_1, %c0_2] : memref<4x128xf32, #tpu.memory_space<vmem>>, vector<4x128xf32>
    tpu.vector_store %arg2[%c0_1, %c0_2], %0 {strides = array<i32>} : memref<4x128xf32, #tpu.memory_space<vmem>>, vector<4x128xf32>,
    return
  }
  func.func @transform_0(%arg0: i32) -> (i32, i32) {
    %c0_i32 = arith.constant 0 : i32
    %c0_i32_0 = arith.constant 0 : i32
    return %arg0, %c0_i32 : i32, i32
  }
  func.func @transform_1(%arg0: i32) -> (i32, i32) {
    %c0_i32 = arith.constant 0 : i32
    %c0_i32_0 = arith.constant 0 : i32
    return %arg0, %c0_i32 : i32, i32
  }
}

</mosaic_0001>

<llo_original>
// kernel: _squeeze_copy.1
$region0: #{_squeeze_copy.1}
  #allocation0 [shape = 'u32[]', space=smem, size = 0x4, offset = 0x4, fixed_abs, tag = 'smem constant byte address 0x4 - core index']
  #allocation1 [shape = 'u32[144,128]{1,0:T(1,128)}', space=vmem, size = 0x12000, scoped, tag = 'internal scratch']
  %s0 = inlined_call_operand.vmem [shape: f32[4,128], index: 0, kind: input, shape index: {}]
  %s1 = inlined_call_operand.vmem [shape: f32[4,128], index: 1, kind: output, shape index: {}]
  %s2 = sld [smem:[#allocation0]]
  $region14: #{_squeeze_copy.1} parent=0
    _
  %s4 = ssub.s32 1, %s2
  %s5 = scalar_select 0, %s4, %s2
  // Predicated region
  $region2: #{_squeeze_copy.1} parent=0 // pred_check
    _
  $region3: #{_squeeze_copy.1} parent=0 // pred_check_branch
    %7 = sbr.rel (0) target = $region5
  $region4: #{_squeeze_copy.1} parent=0 // pred_region
    _
  $region5: #{_squeeze_copy.1} parent=0 // pred_fallthru
    _
  %v8 = vld [vmem:[%s0] sm:$0xf]
  %9 = vst [vmem:[%s1] sm:$0xf] %v8
  // Predicated region
  $region6: #{_squeeze_copy.1} parent=0 // pred_check
    _
  $region7: #{_squeeze_copy.1} parent=0 // pred_check_branch
    %11 = sbr.rel (0) target = $region9
  $region8: #{_squeeze_copy.1} parent=0 // pred_region
    _
  $region9: #{_squeeze_copy.1} parent=0 // pred_fallthru
    _
  // Predicated region
  $region10: #{_squeeze_copy.1} parent=0 // pred_check
    _
  $region11: #{_squeeze_copy.1} parent=0 // pred_check_branch
    %13 = sbr.rel (0) target = $region13
  $region12: #{_squeeze_copy.1} parent=0 // pred_region
    _
  $region13: #{_squeeze_copy.1} parent=0 // pred_fallthru
    _

</llo_original>
